<compile_context>
chip_gen: v7x
topology: tpu7x:2x2x1
jax: 0.10.0
libtpu: 0.0.40
codegen_flags: <defaults>
</compile_context>

<pallas_src>
import jax
import jax.numpy as jnp
import numpy as np
from jax.experimental import pallas as pl
from jax.experimental.pallas import tpu as pltpu


# ---------------------------------------------------------------------------
# small helpers
# ---------------------------------------------------------------------------
def _round_up(x, m):
    return ((x + m - 1) // m) * m


def _pad2(x, r, c):
    return jnp.pad(x, ((0, r - x.shape[0]), (0, c - x.shape[1])))


def _pad_gate_mat(w, in_pad, h, h_pad):
    """Pad a [In, 4H] gate-blocked matrix to [in_pad, 4*h_pad] per-gate."""
    n_in = w.shape[0]
    w4 = w.reshape(n_in, 4, h)
    w4 = jnp.pad(w4, ((0, in_pad - n_in), (0, 0), (0, h_pad - h)))
    return w4.reshape(in_pad, 4 * h_pad)


def _pad_gate_bias(b, h, h_pad):
    b4 = b.reshape(1, 4, h)
    b4 = jnp.pad(b4, ((0, 0), (0, 0), (0, h_pad - h)))
    return b4.reshape(1, 4 * h_pad)


def _tpu_info():
    """(physical VMEM bytes, chip has 2 TensorCores).  Conservative fallbacks."""
    vmem = 64 << 20          # v7x per-core VMEM: a safe lower bound everywhere
    two_cores = False
    try:
        vmem = int(pltpu.get_tpu_info().vmem_capacity_bytes)
    except Exception:
        pass
    try:
        kind = jax.devices()[0].device_kind.lower()
        two_cores = "7" in kind          # v7x: 2 TCs/chip; v5e/v6e: 1
    except Exception:
        pass
    return vmem, two_cores


def _vmem_limit(est_bytes, vmem_phys):
    # Generation-aware cap: ~48 MiB on v7x (64 MiB phys), ~96 MiB on v5e/v6e.
    cap = (vmem_phys * 3) // 4
    return int(min(max(int(1.5 * est_bytes) + (4 << 20), 16 << 20), cap))


# ---------------------------------------------------------------------------
# Shared tiled GEMM + bias kernel (used for h0/c0 init, input proj, logits).
# ---------------------------------------------------------------------------
def _matmul_bias_kernel(x_ref, w_ref, b_ref, o_ref):
    o_ref[...] = (jnp.dot(x_ref[...], w_ref[...],
                          preferred_element_type=jnp.float32)
                  + b_ref[...]).astype(o_ref.dtype)


def _matmul_bias(x, w, b, out_dtype, vmem_phys):
    """out[M, N] = x[M, K] @ w[K, N] + b[1, N].

    N tiles on the OUTER grid axis and M tiles inner, with tm as large as the
    VMEM budget allows (multiple of 8 and dividing M), so every w tile is read
    from HBM exactly once; when tm == M, x is also read exactly once.
    """
    M, K = x.shape
    N = w.shape[1]
    xb = jnp.dtype(x.dtype).itemsize
    wb = jnp.dtype(w.dtype).itemsize
    ob = jnp.dtype(out_dtype).itemsize

    tn = min(512, N)
    while N % tn:                       # N is a multiple of 128 -> terminates
        tn -= 128

    budget = (vmem_phys * 3) // 5
    fixed = 2 * K * tn * wb + 2 * tn * 4          # w tiles (x2 buf) + bias
    per_row = 2 * K * xb + 2 * tn * ob            # x + out tiles (x2 buf)
    tm = (max(budget - fixed, 0) // max(per_row, 1)) // 8 * 8
    tm = min(M, max(8, tm))
    while M % tm:                       # M is a multiple of 8 -> terminates
        tm -= 8
    est = fixed + tm * per_row

    return pl.pallas_call(
        _matmul_bias_kernel,
        out_shape=jax.ShapeDtypeStruct((M, N), out_dtype),
        grid=(N // tn, M // tm),
        in_specs=[
            pl.BlockSpec((tm, K), lambda j, i: (i, 0)),
            pl.BlockSpec((K, tn), lambda j, i: (0, j)),
            pl.BlockSpec((1, tn), lambda j, i: (0, j)),
        ],
        out_specs=pl.BlockSpec((tm, tn), lambda j, i: (i, j)),
        compiler_params=pltpu.CompilerParams(
            dimension_semantics=("parallel", "parallel"),
            vmem_limit_bytes=_vmem_limit(est, vmem_phys)),
    )(x, w, b)


# ---------------------------------------------------------------------------
# Kernel 1: LSTM recurrence (only w_hh resident; TT timesteps per grid step).
# ---------------------------------------------------------------------------
def _lstm_kernel(h0_ref, c0_ref, gx_ref, whh_ref, hs_ref, h_ref, c_ref, g_ref):
    tc = pl.program_id(1)
    H = h_ref.shape[-1]
    TT = gx_ref.shape[0]

    @pl.when(tc == 0)
    def _init():
        h_ref[...] = h0_ref[...]
        c_ref[...] = c0_ref[...]

    # Static unroll over the time block (bounded live ranges: state and gate
    # pre-activations round-trip through VMEM scratch each iteration).
    for tt in range(TT):
        h = h_ref[...]
        # gates = hoisted input projection (biases folded in) + recurrent term.
        g_ref[...] = gx_ref[tt] + jnp.dot(
            h.astype(whh_ref.dtype), whh_ref[...],
            preferred_element_type=jnp.float32)
        # PyTorch LSTM gate order: i, f, g, o.  H_pad is a lane multiple, so
        # the slices are tile-aligned; gate math stays f32.
        i_g = jax.nn.sigmoid(g_ref[:, 0 * H:1 * H])
        f_g = jax.nn.sigmoid(g_ref[:, 1 * H:2 * H])
        g_g = jnp.tanh(g_ref[:, 2 * H:3 * H])
        o_g = jax.nn.sigmoid(g_ref[:, 3 * H:4 * H])
        c_new = f_g * c_ref[...] + i_g * g_g
        h_new = o_g * jnp.tanh(c_new)
        c_ref[...] = c_new
        h_ref[...] = h_new
        # Batch-major hidden-state output (static sublane-offset store), so the
        # logits GEMM output needs no transpose afterwards.
        hs_ref[:, tt, :] = h_new.astype(hs_ref.dtype)


# ---------------------------------------------------------------------------
# Wrapper
# ---------------------------------------------------------------------------
def caption_net_forward(params, image_vectors, captions_ix, *,
                        compute_dtype=jnp.float32, logits_dtype=jnp.float32):
    B, F = image_vectors.shape
    T = captions_ix.shape[1]
    E = params["emb"].shape[1]
    H = params["w_hh"].shape[0]
    V = params["w_out"].shape[1]

    cd = jnp.dtype(compute_dtype)
    cdb = cd.itemsize
    vmem_phys, two_cores = _tpu_info()

    # ---- alignment / padding -------------------------------------------------
    TT = 8                                  # timesteps per recurrence grid step
    sub = 8 * max(1, 4 // cdb)              # 8 rows (f32) / 16 rows (bf16)
    B_pad = _round_up(B, sub)
    if two_cores and B_pad >= 2 * sub:      # split batch only on v7x (2 TCs)
        B_pad = _round_up(B_pad, 2 * sub)
        nb = 2
    else:
        nb = 1
    bb = B_pad // nb
    T_pad = _round_up(T, TT)
    F_pad = _round_up(F, 128)
    E_pad = _round_up(E, 128)
    H_pad = _round_up(H, 128)
    V_pad = _round_up(V, 128)

    # ---- padded / cast parameters ---------------------------------------------
    img = jnp.pad(image_vectors, ((0, B_pad - B), (0, F_pad - F))).astype(cd)
    w_c0 = _pad2(params["w_c0"], F_pad, H_pad).astype(cd)
    b_c0 = _pad2(params["b_c0"], 1, H_pad)                            # f32
    w_h0 = _pad2(params["w_h0"], F_pad, H_pad).astype(cd)
    b_h0 = _pad2(params["b_h0"], 1, H_pad)                            # f32
    w_ih = _pad_gate_mat(params["w_ih"], E_pad, H, H_pad).astype(cd)
    w_hh = _pad_gate_mat(params["w_hh"], H_pad, H, H_pad).astype(cd)
    b_gates = _pad_gate_bias(params["b_ih"] + params["b_hh"], H, H_pad)  # f32
    w_out = _pad2(params["w_out"], H_pad, V_pad).astype(cd)
    b_out = _pad2(params["b_out"], 1, V_pad)                          # f32

    # ---- hoisted GEMMs (full-MXU-efficiency Pallas matmuls) -------------------
    # (h_0, c_0) exactly as the PyTorch code wires them: h0 <- cnn_to_c0,
    # c0 <- cnn_to_h0 (nn.LSTM interprets the tuple as (h_0, c_0)).  Intentional.
    h0 = _matmul_bias(img, w_c0, b_c0, jnp.float32, vmem_phys)        # [B_pad,H_pad]
    c0 = _matmul_bias(img, w_h0, b_h0, jnp.float32, vmem_phys)

    # Embedding gather stays in XLA; gathered directly time-major so the
    # transpose acts on the tiny int32 index matrix, not an activation tensor.
    # TODO(synk): the nn.Embedding gather itself is left to XLA (jnp.take).
    emb_tab = jnp.pad(params["emb"], ((0, 0), (0, E_pad - E))).astype(cd)
    idx = jnp.pad(captions_ix, ((0, B_pad - B), (0, T_pad - T)))      # [B_pad,T_pad]
    emb_tm = jnp.take(emb_tab, idx.T, axis=0)                         # [T_pad,B_pad,E_pad]

    # Input projection hoisted out of the serial loop (biases folded in, f32 out).
    gx = _matmul_bias(emb_tm.reshape(T_pad * B_pad, E_pad), w_ih, b_gates,
                      jnp.float32, vmem_phys)
    gx = gx.reshape(T_pad, B_pad, 4 * H_pad)

    # ---- kernel 1: serial recurrence ------------------------------------------
    est_a = (2 * H_pad * 4 * H_pad * cdb          # w_hh (double-buffered default)
             + 2 * 2 * bb * H_pad * 4             # h0 / c0 blocks (f32, x2 buf)
             + 2 * TT * bb * 4 * H_pad * 4        # gates_x blocks (f32, x2 buf)
             + 2 * bb * TT * H_pad * cdb          # hs blocks (x2 buf)
             + 2 * bb * H_pad * 4                 # h / c scratch
             + bb * 4 * H_pad * 4)                # gates scratch
    # NOTE: for very large H (H_pad >= 2048) on v7x, w_hh should additionally be
    # tiled along the 4H gate axis / single-buffered; unnecessary at these sizes.

    hs = pl.pallas_call(
        _lstm_kernel,
        out_shape=jax.ShapeDtypeStruct((B_pad, T_pad, H_pad), cd),
        grid=(nb, T_pad // TT),
        in_specs=[
            pl.BlockSpec((bb, H_pad), lambda b, t: (b, 0)),              # h0
            pl.BlockSpec((bb, H_pad), lambda b, t: (b, 0)),              # c0
            pl.BlockSpec((TT, bb, 4 * H_pad), lambda b, t: (t, b, 0)),   # gates_x
            pl.BlockSpec((H_pad, 4 * H_pad), lambda b, t: (0, 0)),       # w_hh
        ],
        out_specs=pl.BlockSpec((bb, TT, H_pad), lambda b, t: (b, t, 0)),
        scratch_shapes=[pltpu.VMEM((bb, H_pad), jnp.float32),            # h state
                        pltpu.VMEM((bb, H_pad), jnp.float32),            # c state
                        pltpu.VMEM((bb, 4 * H_pad), jnp.float32)],       # gates
        compiler_params=pltpu.CompilerParams(
            dimension_semantics=("parallel", "arbitrary"),
            vmem_limit_bytes=_vmem_limit(est_a, vmem_phys)),
    )(h0, c0, gx, w_hh)

    # ---- kernel 2: vocab projection (hs already batch-major) ------------------
    logits = _matmul_bias(hs.reshape(B_pad * T_pad, H_pad), w_out, b_out,
                          logits_dtype, vmem_phys)
    logits = logits.reshape(B_pad, T_pad, V_pad)
    # No transpose needed - just drop zero padding.
    return logits[:B, :T, :V]                                          # [B, T, V]


# ---------------------------------------------------------------------------
# Params / reference
# ---------------------------------------------------------------------------
def init_params(key, n_tokens, emb_size, lstm_units, cnn_feature_size):
    ks = jax.random.split(key, 11)
    s = 0.1

    def rnd(k, shape):
        return jax.random.normal(k, shape, jnp.float32) * s

    return dict(
        # Linear weights stored transposed: [in, out]
        w_h0=rnd(ks[0], (cnn_feature_size, lstm_units)),
        b_h0=rnd(ks[1], (1, lstm_units)),
        w_c0=rnd(ks[2], (cnn_feature_size, lstm_units)),
        b_c0=rnd(ks[3], (1, lstm_units)),
        emb=rnd(ks[4], (n_tokens, emb_size)),
        w_ih=rnd(ks[5], (emb_size, 4 * lstm_units)),
        b_ih=rnd(ks[6], (1, 4 * lstm_units)),
        w_hh=rnd(ks[7], (lstm_units, 4 * lstm_units)),
        b_hh=rnd(ks[8], (1, 4 * lstm_units)),
        w_out=rnd(ks[9], (lstm_units, n_tokens)),
        b_out=rnd(ks[10], (1, n_tokens)),
    )


def reference_forward(params, image_vectors, captions_ix):
    """Pure-JAX reference with identical semantics (for verification)."""
    H = params["w_hh"].shape[0]
    h = image_vectors @ params["w_c0"] + params["b_c0"]
    c = image_vectors @ params["w_h0"] + params["b_h0"]
    emb = jnp.take(params["emb"], captions_ix, axis=0)                # [B, T, E]

    def step(carry, x_t):
        h, c = carry
        gates = (x_t @ params["w_ih"] + h @ params["w_hh"]
                 + params["b_ih"] + params["b_hh"])
        i = jax.nn.sigmoid(gates[:, :H])
        f = jax.nn.sigmoid(gates[:, H:2 * H])
        g = jnp.tanh(gates[:, 2 * H:3 * H])
        o = jax.nn.sigmoid(gates[:, 3 * H:4 * H])
        c = f * c + i * g
        h = o * jnp.tanh(c)
        return (h, c), h

    _, hs = jax.lax.scan(step, (h, c), jnp.transpose(emb, (1, 0, 2)))
    logits = hs @ params["w_out"] + params["b_out"]                   # [T, B, V]
    return jnp.transpose(logits, (1, 0, 2))                           # [B, T, V]


if __name__ == "__main__":
    # Small shapes consistent with the module's forward.
    n_tokens, emb_size, lstm_units, cnn_feature_size = 16, 32, 32, 64
    batch, seq = 2, 8

    key = jax.random.PRNGKey(0)
    kp, ki, kc = jax.random.split(key, 3)
    params = init_params(kp, n_tokens, emb_size, lstm_units, cnn_feature_size)
    image_vectors = jax.random.normal(ki, (batch, cnn_feature_size), jnp.float32)
    captions_ix = jax.random.randint(kc, (batch, seq), 0, n_tokens)

    # f32 path, small batch.
    out = jax.block_until_ready(caption_net_forward(params, image_vectors, captions_ix))
    assert out.shape == (batch, seq, n_tokens)
    ref = reference_forward(params, image_vectors, captions_ix)
    np.testing.assert_allclose(np.asarray(out), np.asarray(ref), rtol=1e-4, atol=1e-4)

    # f32 path, larger batch (exercises batch padding and, on v7x, the 2-way split).
    batch2 = 20
    ki2, kc2 = jax.random.split(jax.random.PRNGKey(1), 2)
    image_vectors2 = jax.random.normal(ki2, (batch2, cnn_feature_size), jnp.float32)
    captions_ix2 = jax.random.randint(kc2, (batch2, seq), 0, n_tokens)
    out2 = jax.block_until_ready(
        caption_net_forward(params, image_vectors2, captions_ix2))
    ref2 = reference_forward(params, image_vectors2, captions_ix2)
    np.testing.assert_allclose(np.asarray(out2), np.asarray(ref2), rtol=1e-4, atol=1e-4)

    # bf16 matmul-operand path (f32 state / accumulation), loose tolerance.
    out_bf16 = jax.block_until_ready(
        caption_net_forward(params, image_vectors, captions_ix,
                            compute_dtype=jnp.bfloat16))
    np.testing.assert_allclose(np.asarray(out_bf16), np.asarray(ref),
                               rtol=1e-1, atol=1e-1)

    print("KERNEL_OK")
</pallas_src>

<mosaic_0001>
module attributes {stable_mosaic.version = 11 : i64} {
  func.func @_matmul_bias_kernel(%arg0: i32, %arg1: i32, %arg2: memref<8x128xf32, #tpu.memory_space<vmem>>, %arg3: memref<128x128xf32, #tpu.memory_space<vmem>>, %arg4: memref<1x128xf32, #tpu.memory_space<vmem>>, %arg5: memref<8x128xf32, #tpu.memory_space<vmem>>) attributes {dimension_semantics = [#tpu.dimension_semantics<parallel>, #tpu.dimension_semantics<parallel>], iteration_bounds = array<i64: 1, 1>, scalar_prefetch = 0 : i64, scratch_operands = 0 : i64, tpu.core_type = #tpu.core_type<tc>, window_params = [{transform_indices = @transform_0, window_bounds = array<i64: 8, 128>}, {transform_indices = @transform_1, window_bounds = array<i64: 128, 128>}, {transform_indices = @transform_2, window_bounds = array<i64: 1, 128>}, {transform_indices = @transform_3, window_bounds = array<i64: 8, 128>}]} {
    %c0 = arith.constant 0 : index
    %c0_0 = arith.constant 0 : index
    %0 = vector.load %arg2[%c0, %c0_0] : memref<8x128xf32, #tpu.memory_space<vmem>>, vector<8x128xf32>
    %c0_1 = arith.constant 0 : index
    %c0_2 = arith.constant 0 : index
    %1 = vector.load %arg3[%c0_1, %c0_2] : memref<128x128xf32, #tpu.memory_space<vmem>>, vector<128x128xf32>
    %cst = arith.constant dense<0.000000e+00> : vector<8x128xf32>
    %2 = tpu.matmul %0, %1, %cst {dimension_numbers = #tpu.dot_dimension_numbers<[1], [0], [0], [1], [0, 0, 1, 1], [], []>} : vector<8x128xf32>, vector<128x128xf32>, vector<8x128xf32> -> vector<8x128xf32>
    %c0_3 = arith.constant 0 : index
    %c0_4 = arith.constant 0 : index
    %3 = vector.load %arg4[%c0_3, %c0_4] : memref<1x128xf32, #tpu.memory_space<vmem>>, vector<1x128xf32>
    %4 = vector.broadcast %3 : vector<1x128xf32> to vector<8x128xf32>
    %5 = arith.addf %2, %4 : vector<8x128xf32>
    %c0_5 = arith.constant 0 : index
    %c0_6 = arith.constant 0 : index
    %6 = vector.load %arg5[%c0_5, %c0_6] : memref<8x128xf32, #tpu.memory_space<vmem>>, vector<8x128xf32>
    tpu.vector_store %arg5[%c0_5, %c0_6], %5 {strides = array<i32>} : memref<8x128xf32, #tpu.memory_space<vmem>>, vector<8x128xf32>,
    return
  }
  func.func @transform_0(%arg0: i32, %arg1: i32) -> (i32, i32) {
    %c0_i32 = arith.constant 0 : i32
    %c0_i32_0 = arith.constant 0 : i32
    return %arg1, %c0_i32 : i32, i32
  }
  func.func @transform_1(%arg0: i32, %arg1: i32) -> (i32, i32) {
    %c0_i32 = arith.constant 0 : i32
    %c0_i32_0 = arith.constant 0 : i32
    return %c0_i32, %arg0 : i32, i32
  }
  func.func @transform_2(%arg0: i32, %arg1: i32) -> (i32, i32) {
    %c0_i32 = arith.constant 0 : i32
    %c0_i32_0 = arith.constant 0 : i32
    return %c0_i32, %arg0 : i32, i32
  }
  func.func @transform_3(%arg0: i32, %arg1: i32) -> (i32, i32) {
    %c0_i32 = arith.constant 0 : i32
    return %arg1, %arg0 : i32, i32
  }
}

</mosaic_0001>

<llo_original>
// kernel: tpu_custom_call.1
$region0: #{tpu_custom_call.1}
  #allocation0 [shape = 'u32[]', space=smem, size = 0x4, offset = 0x4, fixed_abs, tag = 'smem constant byte address 0x4 - core index']
  #allocation1 [shape = 'u32[144,128]{1,0:T(1,128)}', space=vmem, size = 0x12000, scoped, tag = 'internal scratch']
  %s0 = inlined_call_operand.hbm [shape: f32[8,128], index: 0, kind: input, shape index: {}]
  %s1 = inlined_call_operand.hbm [shape: f32[128,128], index: 1, kind: input, shape index: {}]
  %s2 = inlined_call_operand.vmem [shape: f32[1,128], index: 2, kind: input, shape index: {}]
  %s3 = inlined_call_operand.hbm [shape: f32[8,128], index: 3, kind: output, shape index: {}]
  %s4 = sld [smem:[#allocation0]]
  $region30: #{tpu_custom_call.1} parent=0
    _
  %s6 = ssub.s32 1, %s4
  %s7 = scalar_select 0, %s6, %s4
  $region1: #{tpu_custom_call.1} parent=0
    #allocation2 [shape = 'u8[4096]{0}', space=vmem, size = 0x1000, scoped, tag = 'input window, operand 0, single buffered']
    #allocation3 [shape = 's32[1]{0}', space=sflag, size = 0x4, scoped, tag = 'scoped memory for tpu_custom_call.1']
    #allocation4 [shape = 's32[1]{0}', space=sflag, size = 0x4, scoped, tag = 'scoped memory for tpu_custom_call.1']
    #allocation5 [shape = 'u8[65536]{0}', space=vmem, size = 0x10000, scoped, tag = 'input window, operand 1, single buffered']
    #allocation6 [shape = 's32[1]{0}', space=sflag, size = 0x4, scoped, tag = 'scoped memory for tpu_custom_call.1']
    #allocation7 [shape = 'u8[4096]{0}', space=vmem, size = 0x1000, scoped, tag = 'output window, operand 0, single buffered']
    %8 = vsyncpa [#allocation3], 0
    %9 = vsyncpa [#allocation6], 0
    %10 = vsyncpa [#allocation4], 0
    // Predicated region
    $region2: #{tpu_custom_call.1} parent=1 // pred_check
      _
    $region3: #{tpu_custom_call.1} parent=1 // pred_check_branch
      %12 = sbr.rel (0) target = $region5
    $region4: #{tpu_custom_call.1} parent=1 // pred_region
      %s14 = ssub.s32 128, 128
      %15 = vsyncadd [#allocation3], %s14
      %s17 = sshll.u32 [#allocation2], 4
      %s18 = int_to_ptr.vmem [resolvable:$true] %s17
      %20 = dma.hbm_to_vmem [thread:$0]  %s0, 128, %s18, [#allocation3]
    $region5: #{tpu_custom_call.1} parent=1 // pred_fallthru
      _
    // Predicated region
    $region6: #{tpu_custom_call.1} parent=1 // pred_check
      _
    $region7: #{tpu_custom_call.1} parent=1 // pred_check_branch
      %22 = sbr.rel (0) target = $region9
    $region8: #{tpu_custom_call.1} parent=1 // pred_region
      %s24 = ssub.s32 2048, 2048
      %25 = vsyncadd [#allocation6], %s24
      %s26 = sshll.u32 [#allocation5], 4
      %s27 = int_to_ptr.vmem [resolvable:$true] %s26
      %32 = dma.hbm_to_vmem [thread:$0]  %s1, 2048, %s27, [#allocation6], 128, 128, 8
    $region9: #{tpu_custom_call.1} parent=1 // pred_fallthru
      _
    // Predicated region
    $region10: #{tpu_custom_call.1} parent=1 // pred_check
      _
    $region11: #{tpu_custom_call.1} parent=1 // pred_check_branch
      %34 = sbr.rel (0) target = $region13
    $region12: #{tpu_custom_call.1} parent=1 // pred_region
      _
    $region13: #{tpu_custom_call.1} parent=1 // pred_fallthru
      _
    // Predicated region
    $region14: #{tpu_custom_call.1} parent=1 // pred_check
      _
    $region15: #{tpu_custom_call.1} parent=1 // pred_check_branch
      %36 = sbr.rel (0) target = $region17
    $region16: #{tpu_custom_call.1} parent=1 // pred_region
      %37 = dma.done [#allocation3], 128
    $region17: #{tpu_custom_call.1} parent=1 // pred_fallthru
      _
    // Predicated region
    $region18: #{tpu_custom_call.1} parent=1 // pred_check
      _
    $region19: #{tpu_custom_call.1} parent=1 // pred_check_branch
      %39 = sbr.rel (0) target = $region21
    $region20: #{tpu_custom_call.1} parent=1 // pred_region
      %40 = dma.done [#allocation6], 2048
    $region21: #{tpu_custom_call.1} parent=1 // pred_fallthru
      _
    %v41 = vld [vmem:[#allocation2] sm:$0xff]
    %v42 = vld [vmem:[#allocation5] sm:$0xff]
    %v43 = vld [vmem:[#allocation5 + $0x8] sm:$0xff]
    %v44 = vld [vmem:[#allocation5 + $0x10] sm:$0xff]
    %v45 = vld [vmem:[#allocation5 + $0x18] sm:$0xff]
    %v46 = vld [vmem:[#allocation5 + $0x20] sm:$0xff]
    %v47 = vld [vmem:[#allocation5 + $0x28] sm:$0xff]
    %v48 = vld [vmem:[#allocation5 + $0x30] sm:$0xff]
    %v49 = vld [vmem:[#allocation5 + $0x38] sm:$0xff]
    %v50 = vld [vmem:[#allocation5 + $0x40] sm:$0xff]
    %v51 = vld [vmem:[#allocation5 + $0x48] sm:$0xff]
    %v52 = vld [vmem:[#allocation5 + $0x50] sm:$0xff]
    %v53 = vld [vmem:[#allocation5 + $0x58] sm:$0xff]
    %v54 = vld [vmem:[#allocation5 + $0x60] sm:$0xff]
    %v55 = vld [vmem:[#allocation5 + $0x68] sm:$0xff]
    %v56 = vld [vmem:[#allocation5 + $0x70] sm:$0xff]
    %v57 = vld [vmem:[#allocation5 + $0x78] sm:$0xff]
    %v58 = vld [vmem:[%s2] sm:$0x1]
    %v60 = vlaneseq
    %v61 = vshrl.u32 %v60, 7
    %v62 = vsub.s32 0, %v61
    %v63 = vrot.slane %v58, %v62
    %65 = vmatprep.subr.mxu0 0.0
    %66 = vmatpush1.msra.mxu0 %v42
    %67 = vmatprep.subr.mxu0 0.0
    %68 = vmatpush1.msra.mxu0 %v43
    %69 = vmatprep.subr.mxu0 0.0
    %70 = vmatpush1.msra.mxu0 %v44
    %71 = vmatprep.subr.mxu0 0.0
    %72 = vmatpush1.msra.mxu0 %v45
    %73 = vmatprep.subr.mxu0 0.0
    %74 = vmatpush1.msra.mxu0 %v46
    %75 = vmatprep.subr.mxu0 0.0
    %76 = vmatpush1.msra.mxu0 %v47
    %77 = vmatprep.subr.mxu0 0.0
    %78 = vmatpush1.msra.mxu0 %v48
    %79 = vmatprep.subr.mxu0 0.0
    %80 = vmatpush1.msra.mxu0 %v49
    %81 = vmatprep.subr.mxu0 0.0
    %82 = vmatpush1.msra.mxu0 %v50
    %83 = vmatprep.subr.mxu0 0.0
    %84 = vmatpush1.msra.mxu0 %v51
    %85 = vmatprep.subr.mxu0 0.0
    %86 = vmatpush1.msra.mxu0 %v52
    %87 = vmatprep.subr.mxu0 0.0
    %88 = vmatpush1.msra.mxu0 %v53
    %89 = vmatprep.subr.mxu0 0.0
    %90 = vmatpush1.msra.mxu0 %v54
    %91 = vmatprep.subr.mxu0 0.0
    %92 = vmatpush1.msra.mxu0 %v55
    %93 = vmatprep.subr.mxu0 0.0
    %94 = vmatpush1.msra.mxu0 %v56
    %95 = vmatprep.subr.mxu0 0.0
    %96 = vmatpush1.msra.mxu0 %v57
    %97 = vmatprep.subr.mxu0 0.0
    %98 = vmatpush1.msra.mxu0 0.0
    %99 = vmatprep.subr.mxu0 0.0
    %100 = vmatpush1.msra.mxu0 0.0
    %101 = vmatprep.subr.mxu0 0.0
    %102 = vmatpush1.msra.mxu0 0.0
    %103 = vmatprep.subr.mxu0 0.0
    %104 = vmatpush1.msra.mxu0 0.0
    %105 = vmatprep.subr.mxu0 0.0
    %106 = vmatpush1.msra.mxu0 0.0
    %107 = vmatprep.subr.mxu0 0.0
    %108 = vmatpush1.msra.mxu0 0.0
    %109 = vmatprep.subr.mxu0 0.0
    %110 = vmatpush1.msra.mxu0 0.0
    %111 = vmatprep.subr.mxu0 0.0
    %112 = vmatpush1.msra.mxu0 0.0
    %113 = vmatprep.subr.mxu0 0.0
    %114 = vmatpush1.msra.mxu0 0.0
    %115 = vmatprep.subr.mxu0 0.0
    %116 = vmatpush1.msra.mxu0 0.0
    %117 = vmatprep.subr.mxu0 0.0
    %118 = vmatpush1.msra.mxu0 0.0
    %119 = vmatprep.subr.mxu0 0.0
    %120 = vmatpush1.msra.mxu0 0.0
    %121 = vmatprep.subr.mxu0 0.0
    %122 = vmatpush1.msra.mxu0 0.0
    %123 = vmatprep.subr.mxu0 0.0
    %124 = vmatpush1.msra.mxu0 0.0
    %125 = vmatprep.subr.mxu0 0.0
    %126 = vmatpush1.msra.mxu0 0.0
    %127 = vmatprep.subr.mxu0 0.0
    %128 = vmatpush1.msra.mxu0 0.0
    %129 = vmatprep.mubr.f32.mxu0 0.0
    %130 = vmatmul.mubr.f32.gmra.mrb[0].mxu0 %v41
    %v131 = vpop.f32.mrb[0].mxu0
    %v132 = vadd.f32 %v63, %v131
    %v133 = vpop.f32.mrb[0].mxu0
    %134 = vdwg.mxu0
    %135 = vst [vmem:[#allocation7] sm:$0xff] %v132
    // Predicated region
    $region22: #{tpu_custom_call.1} parent=1 // pred_check
      _
    $region23: #{tpu_custom_call.1} parent=1 // pred_check_branch
      %137 = sbr.rel (0) target = $region25
    $region24: #{tpu_custom_call.1} parent=1 // pred_region
      %s139 = ssub.s32 128, 128
      %140 = vsyncadd [#allocation4], %s139
      %s142 = sshll.u32 [#allocation7], 4
      %s143 = int_to_ptr.vmem [resolvable:$true] %s142
      %145 = dma.vmem_to_hbm [thread:$0]  %s143, 128, %s3, [#allocation4]
    $region25: #{tpu_custom_call.1} parent=1 // pred_fallthru
      _
    // Predicated region
    $region26: #{tpu_custom_call.1} parent=1 // pred_check
      _
    $region27: #{tpu_custom_call.1} parent=1 // pred_check_branch
      %147 = sbr.rel (0) target = $region29
    $region28: #{tpu_custom_call.1} parent=1 // pred_region
      %148 = dma.done [#allocation4], 128
    $region29: #{tpu_custom_call.1} parent=1 // pred_fallthru
      _
    %149 = vsyncpa [#allocation3], 1
    %150 = vsyncpa [#allocation6], 1
    %151 = vsyncpa [#allocation4], 1

</llo_original>
